<compile_context>
chip_gen: v5e
topology: v5e:2x2
jax: 0.10.0
libtpu: 0.0.40
codegen_flags: <defaults>
</compile_context>

<pallas_src>
import functools

import jax
import jax.numpy as jnp
from jax.experimental import pallas as pl
from jax.experimental.pallas import tpu as pltpu


def _round_up(x, m):
    return (x + m - 1) // m * m


def _vmem_budget():
    """Generation-specific (per-step tile budget bytes, vmem_limit_bytes)."""
    try:
        vmem_bytes = int(getattr(pltpu.get_tpu_info(), "vmem_capacity_bytes",
                                 64 << 20))
    except Exception:                      # conservative (v7x-safe) fallback
        vmem_bytes = 64 << 20
    if vmem_bytes >= (100 << 20):          # v5e / v6e: 128 MiB physical VMEM
        return 16 << 20, 96 << 20
    return 6 << 20, 40 << 20               # v7x: 64 MiB physical VMEM


# ----------------------------------------------------------------------------
# Kernel 1: backbone surrogate in (D, HW) layout.
#   per batch b, HW chunk c, inner HW tile k:
#     fmap[b, :, tile] = W_proj^T (D,C) @ x[b, :, tile]      (bf16 MXU, f32 acc)
#     gsum[c, b]       = sum over the chunk's HW of fmap      (f32 scratch acc)
# ----------------------------------------------------------------------------
def _backbone_kernel(x_ref, w_ref, fmap_ref, gsum_ref, acc_ref, *, out_dtype):
    k = pl.program_id(2)

    @pl.when(k == 0)
    def _():
        acc_ref[...] = jnp.zeros_like(acc_ref)

    x = x_ref[0].astype(jnp.bfloat16)                       # (C, THW) bf16
    fmap = jnp.dot(w_ref[...], x,                           # (D, THW) f32 acc
                   preferred_element_type=jnp.float32)
    fmap_ref[0] = fmap.astype(out_dtype)                    # bf16 writeback
    acc_ref[...] += jnp.sum(fmap, axis=1, keepdims=True)    # (D, 1) f32

    @pl.when(k == pl.num_programs(2) - 1)
    def _():
        gsum_ref[0, 0] = acc_ref[...]                        # partial chunk sum


def backbone_surrogate(x_flat, w_proj_t, *, fmap_dtype=jnp.bfloat16,
                       force_hw_tile=None):
    """x_flat: (B, C, HW) f32 view of NCHW; w_proj_t: (D, C) bf16.

    Returns fmap (B, D, HW) in `fmap_dtype` (NCHW featmaps after free reshape)
    and gsum (n_chunks, B, D) f32 per-chunk HW partial sums.
    """
    B, C, HW = x_flat.shape
    D = w_proj_t.shape[0]
    tile_budget, vmem_limit = _vmem_budget()

    # HW tile: lane multiple of 128, sized so (f32 input + fmap output) columns
    # fit the generation-specific per-step budget (double-buffered by Pallas).
    per_lane_bytes = C * 4 + D * jnp.dtype(fmap_dtype).itemsize
    thw = max(128, (tile_budget // per_lane_bytes) // 128 * 128)
    if force_hw_tile is not None:
        assert force_hw_tile % 128 == 0
        thw = force_hw_tile
    thw = min(thw, _round_up(HW, 128))

    hw_pad = _round_up(HW, thw)
    n_total = hw_pad // thw
    n_chunks = 2 if n_total >= 2 else 1        # outer "parallel" HW split (v7x)
    if n_total % n_chunks:
        n_total += 1
        hw_pad = n_total * thw
    n_inner = n_total // n_chunks

    if hw_pad != HW:
        # Zero padding contributes nothing to the HW sums; the mean downstream
        # divides by the real HW.
        x_flat = jnp.pad(x_flat, ((0, 0), (0, 0), (0, hw_pad - HW)))

    kernel = functools.partial(_backbone_kernel, out_dtype=fmap_dtype)
    fmap, gsum = pl.pallas_call(
        kernel,
        out_shape=(
            jax.ShapeDtypeStruct((B, D, hw_pad), fmap_dtype),
            jax.ShapeDtypeStruct((n_chunks, B, D, 1), jnp.float32),
        ),
        grid=(B, n_chunks, n_inner),
        in_specs=[
            pl.BlockSpec((1, C, thw), lambda b, c, k: (b, 0, c * n_inner + k)),
            pl.BlockSpec((D, C), lambda b, c, k: (0, 0)),
        ],
        out_specs=(
            pl.BlockSpec((1, D, thw), lambda b, c, k: (b, 0, c * n_inner + k)),
            pl.BlockSpec((1, 1, D, 1), lambda b, c, k: (c, b, 0, 0)),
        ),
        scratch_shapes=[pltpu.VMEM((D, 1), jnp.float32)],
        compiler_params=pltpu.CompilerParams(
            dimension_semantics=("parallel", "parallel", "arbitrary"),
            vmem_limit_bytes=vmem_limit,
        ),
        cost_estimate=pl.CostEstimate(
            flops=2 * B * D * C * hw_pad,
            transcendentals=0,
            bytes_accessed=(B * C * hw_pad * 4 + D * C * 2
                            + B * D * hw_pad * jnp.dtype(fmap_dtype).itemsize
                            + n_chunks * B * D * 4),
        ),
    )(x_flat, w_proj_t)

    if hw_pad != HW:
        fmap = fmap[:, :, :HW]
    # (NC, B, D, 1) -> (NC, B, D): tiny XLA-side layout plumbing so the fused
    # head reads gsum with D lane-major (no in-kernel relayout).
    return fmap, gsum.reshape(n_chunks, B, D)


# ----------------------------------------------------------------------------
# Kernel 2 (fused head): global-average-pool combine + BatchNorm1d (training
# batch stats, biased var) + bias-free Linear classifier, tiled over classes.
# BN/pool combine is recomputed per class tile (cheap, hidden under the
# (D, tn) weight DMA); gfeat/feat outputs are revisit-resident.
# ----------------------------------------------------------------------------
def _head_kernel(gsum_ref, gamma_ref, beta_ref, w_ref,
                 score_ref, gfeat_ref, feat_ref, *, inv_hw):
    gfeat = jnp.sum(gsum_ref[...], axis=0) * inv_hw          # (B, D) f32
    mean = jnp.mean(gfeat, axis=0, keepdims=True)
    var = jnp.mean((gfeat - mean) ** 2, axis=0, keepdims=True)   # biased (BN train)
    feat = ((gfeat - mean) * jax.lax.rsqrt(var + 1e-5)
            * gamma_ref[...] + beta_ref[...])
    score_ref[...] = jnp.dot(feat.astype(jnp.bfloat16), w_ref[...],
                             preferred_element_type=jnp.float32)
    gfeat_ref[...] = gfeat
    feat_ref[...] = feat


def head_fused(gsum, gamma, beta, w_cls_t, tn, num_classes, inv_hw):
    NC, B, D = gsum.shape
    n_pad = w_cls_t.shape[1]
    kernel = functools.partial(_head_kernel, inv_hw=inv_hw)
    score, gfeat, feat = pl.pallas_call(
        kernel,
        out_shape=(
            jax.ShapeDtypeStruct((B, n_pad), jnp.float32),
            jax.ShapeDtypeStruct((B, D), jnp.float32),
            jax.ShapeDtypeStruct((B, D), jnp.float32),
        ),
        grid=(n_pad // tn,),
        in_specs=[
            pl.BlockSpec((NC, B, D), lambda j: (0, 0, 0)),
            pl.BlockSpec((1, D), lambda j: (0, 0)),
            pl.BlockSpec((1, D), lambda j: (0, 0)),
            pl.BlockSpec((D, tn), lambda j: (0, j)),
        ],
        out_specs=(
            pl.BlockSpec((B, tn), lambda j: (0, j)),
            pl.BlockSpec((B, D), lambda j: (0, 0)),
            pl.BlockSpec((B, D), lambda j: (0, 0)),
        ),
        compiler_params=pltpu.CompilerParams(
            dimension_semantics=("arbitrary",),
            vmem_limit_bytes=32 * 1024 * 1024,
        ),
        cost_estimate=pl.CostEstimate(
            flops=2 * B * D * n_pad,
            transcendentals=0,
            bytes_accessed=(NC * B * D * 4 + 2 * D * 4 + D * n_pad * 2
                            + B * n_pad * 4 + 2 * B * D * 4),
        ),
    )(gsum, gamma, beta, w_cls_t)
    return score[:, :num_classes], gfeat, feat


# ----------------------------------------------------------------------------
# Wrapper mirroring Transformer.forward
# ----------------------------------------------------------------------------
class TransformerPallas:
    def __init__(self, num_classes, in_channels, in_planes, key, *,
                 cls_tile=None, fmap_dtype=jnp.bfloat16):
        self.num_classes = num_classes
        self.in_planes = in_planes
        self.fmap_dtype = fmap_dtype
        k_proj, k_cls = jax.random.split(key)

        # Surrogate backbone 1x1 projection (kaiming fan_in normal), stored
        # pre-transposed (D, C) in bf16 for the (D,C)@(C,HW) MXU matmul.
        w_proj = (jax.random.normal(k_proj, (in_channels, in_planes),
                                    jnp.float32)
                  * jnp.sqrt(2.0 / in_channels))
        self.w_proj_t = w_proj.T.astype(jnp.bfloat16)        # (D, C)

        # weights_init_kaiming on BatchNorm1d: weight=1, bias=0 (f32 affine).
        self.bn_gamma = jnp.ones((1, in_planes), jnp.float32)
        self.bn_beta = jnp.zeros((1, in_planes), jnp.float32)

        # weights_init_classifier: Linear weight ~ N(0, 0.001), no bias.
        # Stored transposed (D, N_pad) bf16; N padded to the class tile so the
        # classifier stores are lane-dense and the weight stream stays deep.
        n_pad = _round_up(num_classes, 128)
        self.cls_tile = cls_tile if cls_tile is not None else min(n_pad, 2048)
        n_pad = _round_up(n_pad, self.cls_tile)
        w_cls = (jax.random.normal(k_cls, (num_classes, in_planes),
                                   jnp.float32) * 0.001)
        w_cls_t = jnp.zeros((in_planes, n_pad), jnp.float32)
        w_cls_t = w_cls_t.at[:, :num_classes].set(w_cls.T)
        self.w_cls_t = w_cls_t.astype(jnp.bfloat16)

    def forward(self, x, training=True, neck_feat='before', *,
                force_hw_tile=None):
        # x: NCHW [B, C, H, W]; (B, C, H*W) is a free view — no transpose.
        B, C, H, W = x.shape
        x_flat = x.reshape(B, C, H * W)
        fmap, gsum = backbone_surrogate(
            x_flat, self.w_proj_t, fmap_dtype=self.fmap_dtype,
            force_hw_tile=force_hw_tile)
        featmaps = fmap.reshape(B, self.in_planes, H, W)      # already NCHW
        # TODO(synk): dropout_rate > 0.0 would need pltpu.prng_seed/random_bits.
        # TODO(synk): eval mode also streams the classifier weight (result
        #             discarded); split a pool+BN-only head if that matters.
        cls_score, global_feat, feat = head_fused(
            gsum, self.bn_gamma, self.bn_beta, self.w_cls_t,
            self.cls_tile, self.num_classes, inv_hw=1.0 / float(H * W))
        if training:
            return cls_score, global_feat, featmaps
        if neck_feat == 'after':
            return feat, featmaps
        return global_feat, featmaps


# ----------------------------------------------------------------------------
def _reference_forward(model, x):
    """Pure-JAX reference with the same bf16-matmul / f32-accumulate numerics."""
    B, C, H, W = x.shape
    xb = x.reshape(B, C, H * W).astype(jnp.bfloat16)
    fmap = jnp.einsum('dc,bcp->bdp', model.w_proj_t, xb,
                      preferred_element_type=jnp.float32)
    gfeat = jnp.mean(fmap, axis=2)                            # (B, D)
    mean = jnp.mean(gfeat, axis=0, keepdims=True)
    var = jnp.mean((gfeat - mean) ** 2, axis=0, keepdims=True)
    feat = ((gfeat - mean) * jax.lax.rsqrt(var + 1e-5)
            * model.bn_gamma + model.bn_beta)
    w = model.w_cls_t[:, :model.num_classes]
    score = jnp.dot(feat.astype(jnp.bfloat16), w,
                    preferred_element_type=jnp.float32)
    featmaps = fmap.astype(model.fmap_dtype).reshape(B, -1, H, W)
    return score, gfeat, featmaps


def _check(outs, refs, B, num_classes, in_planes, H, W):
    cls_score, global_feat, featmaps = outs
    ref_score, ref_gfeat, ref_fmaps = refs
    assert cls_score.shape == (B, num_classes)
    assert global_feat.shape == (B, in_planes)
    assert featmaps.shape == (B, in_planes, H, W)
    assert jnp.allclose(featmaps.astype(jnp.float32),
                        ref_fmaps.astype(jnp.float32), atol=2e-2, rtol=2e-2)
    assert jnp.allclose(global_feat, ref_gfeat, atol=1e-3, rtol=1e-3)
    assert jnp.allclose(cls_score, ref_score, atol=1e-3, rtol=1e-2)


if __name__ == "__main__":
    key = jax.random.PRNGKey(0)
    k_x, k_params, k_x2 = jax.random.split(key, 3)

    # Test 1: default tiling (single HW tile / single chunk / single class tile).
    B, C, H, W = 2, 4, 16, 16
    in_planes, num_classes = 32, 8
    x = jax.random.normal(k_x, (B, C, H, W), jnp.float32)
    model = TransformerPallas(num_classes, C, in_planes, k_params)
    outs = model.forward(x, training=True)
    jax.block_until_ready(outs)
    _check(outs, _reference_forward(model, x), B, num_classes, in_planes, H, W)

    # Test 2: forced small tiles -> exercises the 2-chunk parallel HW split,
    # the multi-step pool accumulation, and the multi-tile fused BN+classifier.
    B2, C2, H2, W2 = 2, 4, 32, 32
    num_classes2 = 200
    x2 = jax.random.normal(k_x2, (B2, C2, H2, W2), jnp.float32)
    model2 = TransformerPallas(num_classes2, C2, in_planes, k_params,
                               cls_tile=128)
    outs2 = model2.forward(x2, training=True, force_hw_tile=128)
    jax.block_until_ready(outs2)
    _check(outs2, _reference_forward(model2, x2),
           B2, num_classes2, in_planes, H2, W2)

    print("KERNEL_OK")
</pallas_src>

<mosaic_0001>
module attributes {stable_mosaic.version = 11 : i64} {
  func.func @_backbone_kernel(%arg0: i32, %arg1: i32, %arg2: i32, %arg3: memref<1x4x256xf32, #tpu.memory_space<vmem>>, %arg4: memref<32x4xbf16, #tpu.memory_space<vmem>>, %arg5: memref<1x32x256xbf16, #tpu.memory_space<vmem>>, %arg6: memref<1x1x32x1xf32, #tpu.memory_space<vmem>>, %arg7: memref<32x1xf32, #tpu.memory_space<vmem>>) attributes {dimension_semantics = [#tpu.dimension_semantics<parallel>, #tpu.dimension_semantics<parallel>, #tpu.dimension_semantics<arbitrary>], iteration_bounds = array<i64: 2, 1, 1>, scalar_prefetch = 0 : i64, scratch_operands = 1 : i64, tpu.core_type = #tpu.core_type<tc>, window_params = [{transform_indices = @transform_0, window_bounds = array<i64: 1, 4, 256>}, {pipeline_mode = #tpu.pipeline_mode<synchronous>, transform_indices = @transform_1, window_bounds = array<i64: 32, 4>}, {transform_indices = @transform_2, window_bounds = array<i64: 1, 32, 256>}, {transform_indices = @transform_3, window_bounds = array<i64: 1, 1, 32, 1>}]} {
    %c0_i32 = arith.constant 0 : i32
    %0 = arith.cmpi eq, %arg2, %c0_i32 : i32
    %1 = arith.extui %0 : i1 to i32
    %c0_i32_0 = arith.constant 0 : i32
    %2 = arith.cmpi ne, %1, %c0_i32_0 : i32
    scf.if %2 {
      %cst_15 = arith.constant 0.000000e+00 : f32
      %20 = vector.broadcast %cst_15 : f32 to vector<32x1xf32>
      %c0_16 = arith.constant 0 : index
      %c0_17 = arith.constant 0 : index
      %21 = vector.load %arg7[%c0_16, %c0_17] : memref<32x1xf32, #tpu.memory_space<vmem>>, vector<32x1xf32>
      tpu.vector_store %arg7[%c0_16, %c0_17], %20 {strides = array<i32>} : memref<32x1xf32, #tpu.memory_space<vmem>>, vector<32x1xf32>,
    } else {
    }
    %c0 = arith.constant 0 : index
    %c0_1 = arith.constant 0 : index
    %c0_2 = arith.constant 0 : index
    %3 = vector.load %arg3[%c0, %c0_1, %c0_2] : memref<1x4x256xf32, #tpu.memory_space<vmem>>, vector<1x4x256xf32>
    %4 = vector.shape_cast %3 : vector<1x4x256xf32> to vector<4x256xf32>
    %5 = arith.truncf %4 : vector<4x256xf32> to vector<4x256xbf16>
    %c0_3 = arith.constant 0 : index
    %c0_4 = arith.constant 0 : index
    %6 = vector.load %arg4[%c0_3, %c0_4] : memref<32x4xbf16, #tpu.memory_space<vmem>>, vector<32x4xbf16>
    %cst = arith.constant dense<0.000000e+00> : vector<32x256xf32>
    %7 = tpu.matmul %6, %5, %cst {dimension_numbers = #tpu.dot_dimension_numbers<[1], [0], [0], [1], [0, 0, 1, 1], [], []>} : vector<32x4xbf16>, vector<4x256xbf16>, vector<32x256xf32> -> vector<32x256xf32>
    %8 = arith.truncf %7 : vector<32x256xf32> to vector<32x256xbf16>
    %c0_5 = arith.constant 0 : index
    %c0_6 = arith.constant 0 : index
    %c0_7 = arith.constant 0 : index
    %9 = vector.load %arg5[%c0_5, %c0_6, %c0_7] : memref<1x32x256xbf16, #tpu.memory_space<vmem>>, vector<1x32x256xbf16>
    %10 = vector.shape_cast %9 : vector<1x32x256xbf16> to vector<32x256xbf16>
    %11 = vector.shape_cast %8 : vector<32x256xbf16> to vector<1x32x256xbf16>
    tpu.vector_store %arg5[%c0_5, %c0_6, %c0_7], %11 {strides = array<i32>} : memref<1x32x256xbf16, #tpu.memory_space<vmem>>, vector<1x32x256xbf16>,
    %c0_8 = arith.constant 0 : index
    %c0_9 = arith.constant 0 : index
    %12 = vector.load %arg7[%c0_8, %c0_9] : memref<32x1xf32, #tpu.memory_space<vmem>>, vector<32x1xf32>
    %cst_10 = arith.constant dense<0.000000e+00> : vector<32xf32>
    %13 = vector.multi_reduction <add>, %7, %cst_10 [1] : vector<32x256xf32> to vector<32xf32>
    %14 = vector.shape_cast %13 : vector<32xf32> to vector<32x1xf32>
    %15 = arith.addf %12, %14 : vector<32x1xf32>
    %c0_11 = arith.constant 0 : index
    %c0_12 = arith.constant 0 : index
    %16 = vector.load %arg7[%c0_11, %c0_12] : memref<32x1xf32, #tpu.memory_space<vmem>>, vector<32x1xf32>
    tpu.vector_store %arg7[%c0_11, %c0_12], %15 {strides = array<i32>} : memref<32x1xf32, #tpu.memory_space<vmem>>, vector<32x1xf32>,
    %c0_i32_13 = arith.constant 0 : i32
    %17 = arith.cmpi eq, %arg2, %c0_i32_13 : i32
    %18 = arith.extui %17 : i1 to i32
    %c0_i32_14 = arith.constant 0 : i32
    %19 = arith.cmpi ne, %18, %c0_i32_14 : i32
    scf.if %19 {
      %c0_15 = arith.constant 0 : index
      %c0_16 = arith.constant 0 : index
      %20 = vector.load %arg7[%c0_15, %c0_16] : memref<32x1xf32, #tpu.memory_space<vmem>>, vector<32x1xf32>
      %c0_17 = arith.constant 0 : index
      %c0_18 = arith.constant 0 : index
      %c0_19 = arith.constant 0 : index
      %c0_20 = arith.constant 0 : index
      %21 = vector.load %arg6[%c0_17, %c0_18, %c0_19, %c0_20] : memref<1x1x32x1xf32, #tpu.memory_space<vmem>>, vector<1x1x32x1xf32>
      %22 = vector.shape_cast %21 : vector<1x1x32x1xf32> to vector<32x1xf32>
      %23 = vector.shape_cast %20 : vector<32x1xf32> to vector<1x1x32x1xf32>
      tpu.vector_store %arg6[%c0_17, %c0_18, %c0_19, %c0_20], %23 {strides = array<i32>} : memref<1x1x32x1xf32, #tpu.memory_space<vmem>>, vector<1x1x32x1xf32>,
    } else {
    }
    return
  }
  func.func @transform_0(%arg0: i32, %arg1: i32, %arg2: i32) -> (i32, i32, i32) {
    %c1_i32 = arith.constant 1 : i32
    %0 = arith.muli %arg1, %c1_i32 : i32
    %1 = arith.addi %0, %arg2 : i32
    %c0_i32 = arith.constant 0 : i32
    %c0_i32_0 = arith.constant 0 : i32
    return %arg0, %c0_i32, %1 : i32, i32, i32
  }
  func.func @transform_1(%arg0: i32, %arg1: i32, %arg2: i32) -> (i32, i32) {
    %c0_i32 = arith.constant 0 : i32
    %c0_i32_0 = arith.constant 0 : i32
    %c0_i32_1 = arith.constant 0 : i32
    return %c0_i32, %c0_i32_0 : i32, i32
  }
  func.func @transform_2(%arg0: i32, %arg1: i32, %arg2: i32) -> (i32, i32, i32) {
    %c1_i32 = arith.constant 1 : i32
    %0 = arith.muli %arg1, %c1_i32 : i32
    %1 = arith.addi %0, %arg2 : i32
    %c0_i32 = arith.constant 0 : i32
    %c0_i32_0 = arith.constant 0 : i32
    return %arg0, %c0_i32, %1 : i32, i32, i32
  }
  func.func @transform_3(%arg0: i32, %arg1: i32, %arg2: i32) -> (i32, i32, i32, i32) {
    %c0_i32 = arith.constant 0 : i32
    %c0_i32_0 = arith.constant 0 : i32
    %c0_i32_1 = arith.constant 0 : i32
    return %arg1, %arg0, %c0_i32, %c0_i32_0 : i32, i32, i32, i32
  }
}

</mosaic_0001>

<llo_original>
// kernel: tpu_custom_call.1
$region0: #{tpu_custom_call.1}
  #allocation0 [shape = 'u32[]', space=smem, size = 0x4, offset = 0x4, fixed_abs, tag = 'smem constant byte address 0x4 - core index']
  #allocation1 [shape = 'u32[72,128]{1,0:T(1,128)}', space=vmem, size = 0x9000, scoped, tag = 'internal scratch']
  #allocation2 [shape = 'f32[32,1]{1,0:T(8,128)}', space=vmem, size = 0x4000, scoped, tag = 'scratch operand']
  %s0 = inlined_call_operand.vmem [shape: f32[2,4,256], index: 0, kind: input, shape index: {}]
  %s1 = inlined_call_operand.vmem [shape: bf16[32,4], index: 1, kind: input, shape index: {}]
  %s2 = inlined_call_operand.hbm [shape: bf16[2,32,256], index: 2, kind: output, shape index: {0}]
  %s3 = inlined_call_operand.vmem [shape: f32[1,2,32,1], index: 3, kind: output, shape index: {1}]
  %4 = xla_tuple %s2, %s3
  %s5 = sld [smem:[#allocation0]]
  $region57: #{tpu_custom_call.1} parent=0
    _
  %s7 = ssub.s32 1, %s5
  %s8 = scalar_select 0, %s7, %s5
  $region1: #{tpu_custom_call.1} parent=0
    #allocation3 [shape = 'u8[32768]{0}', space=vmem, size = 0x8000, scoped, tag = 'output window, operand 0']
    #allocation4 [shape = 's32[2]{0}', space=sflag, size = 0x8, scoped, tag = 'scoped memory for tpu_custom_call.1']
    %9 = vsyncpa [#allocation4], 0
    %s10 = scalar_lea.sflag [#allocation4], 1
    %11 = vsyncpa %s10, 0
    loop: start=0, step=1, limit=4
    $region2: #{tpu_custom_call.1} parent=1 // loop_pre_header
      _
    $region3: #{tpu_custom_call.1} parent=1 // loop_header
      %s13 = sphi 0, %s17
      %p14 = scmp.ge.s32.totalorder %s13, 4
      %s20 = sphi 0, %s39
      %s21 = sphi 0, %s35
      %s22 = sphi 0, %s31
      %s23 = sphi 0, %s20
      %s24 = sphi 0, %s21
      %s25 = sphi 0, %s22
      %s26 = sphi 0, %s23
      %s27 = sphi 0, %s24
      %s28 = sphi 0, %s25
      %s46 = sphi 0, %s48
      %s49 = sphi 0, %s46
      %s50 = sphi 0, %s49
      %s66 = sphi 0, %s50
      %s70 = sphi 0, %s70
      %s72 = sphi 0, %s70
      %s73 = sphi 0, %s72
      %s87 = sphi 0, %s73
      %s97 = sphi 0, %s99
      %s100 = sphi 0, %s97
      %s101 = sphi 0, %s100
      %s117 = sphi 0, %s101
      %s125 = sphi 0, %s127
      %s128 = sphi 0, %s125
      %s129 = sphi 0, %s128
      %s145 = sphi 0, %s129
    $region4: #{tpu_custom_call.1} parent=1 // loop_header_branch
      %16 = sbr.rel (%p14) target = $region8
    $region5: #{tpu_custom_call.1} parent=1 // loop_body
      %s18 = ssub.s32 %s13, 1
      %s19 = ssub.s32 %s13, 2
      %s29 = sadd.s32 1, %s22
      %p30 = scmp.ge.s32.totalorder %s29, 1
      %s31 = scalar_select %p30, 0, %s29
      %s32 = sadd.s32 1, %s21
      %s33 = scalar_select %p30, %s32, %s21
      %p34 = scmp.ge.s32.totalorder %s33, 1
      %s35 = scalar_select %p34, 0, %s33
      %s36 = sadd.s32 1, %s20
      %s37 = scalar_select %p34, %s36, %s20
      %p38 = scmp.ge.s32.totalorder %s37, 2
      %s39 = scalar_select %p38, 0, %s37
      %s40 = sadd.s32 %s21, %s22
      %s41 = sadd.s32 %s35, %s31
      %s42 = ssub.s32 %s20, %s39
      %s43 = ssub.s32 %s40, %s41
      %s44 = sor.u32 %s42, %s43
      %p45 = scmp.eq.s32.totalorder %s44, 0
      %s47 = sadd.s32 %s46, 1
      %s48 = scalar_select %p45, %s46, %s47
      %p51 = pneg %p45
      %p52 = scmp.eq.s32.totalorder %s13, 1
      %p53 = por %p51, %p52
      %p54 = scmp.ne.s32.totalorder %s46, %s49
      %p55 = scmp.eq.s32.totalorder %s13, 0
      %p56 = por %p54, %p55
      %p57 = scmp.ne.s32.totalorder %s46, %s49
      %p58 = scmp.eq.s32.totalorder %s18, 1
      %p59 = por %p57, %p58
      %p60 = scmp.ne.s32.totalorder %s49, %s50
      %p61 = scmp.eq.s32.totalorder %s18, 0
      %p62 = por %p60, %p61
      %p63 = scmp.ne.s32.totalorder %s49, %s50
      %p64 = scmp.eq.s32.totalorder %s19, 1
      %p65 = por %p63, %p64
      %p67 = scmp.ne.s32.totalorder %s50, %s66
      %p68 = scmp.eq.s32.totalorder %s19, 0
      %p69 = por %p67, %p68
      %s71 = sadd.s32 %s70, 1
      %p74 = scmp.eq.s32.totalorder %s13, 1
      %p75 = scmp.ne.s32.totalorder %s70, %s72
      %p76 = scmp.eq.s32.totalorder %s13, 0
      %p77 = por %p75, %p76
      %p78 = scmp.ne.s32.totalorder %s70, %s72
      %p79 = scmp.eq.s32.totalorder %s18, 1
      %p80 = por %p78, %p79
      %p81 = scmp.ne.s32.totalorder %s72, %s73
      %p82 = scmp.eq.s32.totalorder %s18, 0
      %p83 = por %p81, %p82
      %p84 = scmp.ne.s32.totalorder %s72, %s73
      %p85 = scmp.eq.s32.totalorder %s19, 1
      %p86 = por %p84, %p85
      %p88 = scmp.ne.s32.totalorder %s73, %s87
      %p89 = scmp.eq.s32.totalorder %s19, 0
      %p90 = por %p88, %p89
      %s91 = sadd.s32 %s21, %s22
      %s92 = sadd.s32 %s35, %s31
      %s93 = ssub.s32 %s20, %s39
      %s94 = ssub.s32 %s91, %s92
      %s95 = sor.u32 %s93, %s94
      %p96 = scmp.eq.s32.totalorder %s95, 0
      %s98 = sadd.s32 %s97, 1
      %s99 = scalar_select %p96, %s97, %s98
      %p102 = pneg %p96
      %p103 = scmp.eq.s32.totalorder %s13, 1
      %p104 = por %p102, %p103
      %p105 = scmp.ne.s32.totalorder %s97, %s100
      %p106 = scmp.eq.s32.totalorder %s13, 0
      %p107 = por %p105, %p106
      %p108 = scmp.ne.s32.totalorder %s97, %s100
      %p109 = scmp.eq.s32.totalorder %s18, 1
      %p110 = por %p108, %p109
      %p111 = scmp.ne.s32.totalorder %s100, %s101
      %p112 = scmp.eq.s32.totalorder %s18, 0
      %p113 = por %p111, %p112
      %p114 = scmp.ne.s32.totalorder %s100, %s101
      %p115 = scmp.eq.s32.totalorder %s19, 1
      %p116 = por %p114, %p115
      %p118 = scmp.ne.s32.totalorder %s101, %s117
      %p119 = scmp.eq.s32.totalorder %s19, 0
      %p120 = por %p118, %p119
      %s121 = ssub.s32 %s21, %s35
      %s122 = ssub.s32 %s20, %s39
      %s123 = sor.u32 %s121, %s122
      %p124 = scmp.eq.s32.totalorder %s123, 0
      %s126 = sadd.s32 %s125, 1
      %s127 = scalar_select %p124, %s125, %s126
      %p130 = pneg %p124
      %p131 = scmp.eq.s32.totalorder %s13, 1
      %p132 = por %p130, %p131
      %p133 = scmp.ne.s32.totalorder %s125, %s128
      %p134 = scmp.eq.s32.totalorder %s13, 0
      %p135 = por %p133, %p134
      %p136 = scmp.ne.s32.totalorder %s125, %s128
      %p137 = scmp.eq.s32.totalorder %s18, 1
      %p138 = por %p136, %p137
      %p139 = scmp.ne.s32.totalorder %s128, %s129
      %p140 = scmp.eq.s32.totalorder %s18, 0
      %p141 = por %p139, %p140
      %p142 = scmp.ne.s32.totalorder %s128, %s129
      %p143 = scmp.eq.s32.totalorder %s19, 1
      %p144 = por %p142, %p143
      %p146 = scmp.ne.s32.totalorder %s129, %s145
      %p147 = scmp.eq.s32.totalorder %s19, 0
      %p148 = por %p146, %p147
      %p149 = scmp.le.s32.totalorder 1, %s13
      %p150 = scmp.lt.s32.totalorder %s13, 3
      %p151 = pnand %p149, %p150
      %p152 = pneg %p151
      // Predicated region
      $region9: #{tpu_custom_call.1} parent=5 // pred_check
        _
      $region10: #{tpu_custom_call.1} parent=5 // pred_check_branch
        %154 = sbr.rel (%p151) target = $region12
      $region11: #{tpu_custom_call.1} parent=5 // pred_region
        %s155 = ssub.s32 %s13, 1
        // Predicated region
        $region13: #{tpu_custom_call.1} parent=11 // pred_check
          %p156 = pneg %p83
        $region14: #{tpu_custom_call.1} parent=11 // pred_check_branch
          %158 = sbr.rel (%p156) target = $region16
        $region15: #{tpu_custom_call.1} parent=11 // pred_region
          _
        $region16: #{tpu_custom_call.1} parent=11 // pred_fallthru
          _
      $region12: #{tpu_custom_call.1} parent=5 // pred_fallthru
        _
      %p159 = scmp.lt.s32.totalorder %s13, 2
      // Predicated region
      $region17: #{tpu_custom_call.1} parent=5 // pred_check
        %p160 = pneg %p159
      $region18: #{tpu_custom_call.1} parent=5 // pred_check_branch
        %162 = sbr.rel (%p160) target = $region20
      $region19: #{tpu_custom_call.1} parent=5 // pred_region
        // Predicated region
        $region21: #{tpu_custom_call.1} parent=19 // pred_check
          %p163 = pneg %p56
        $region22: #{tpu_custom_call.1} parent=19 // pred_check_branch
          %165 = sbr.rel (%p163) target = $region24
        $region23: #{tpu_custom_call.1} parent=19 // pred_region
          %s166 = sadd.s32 %s21, %s22
          %s167 = smul.u32 2, %s166
          %p168 = scmp.lt.s32.totalorder %s20, 1
          %s169 = scalar_select %p168, %s20, 1
          %p170 = scmp.lt.s32.totalorder %s167, 1
          %s171 = scalar_select %p170, %s167, 1
          %s172 = smul.addr %s169, 2
          %s173 = sadd.s32 %s171, %s172
          %s174 = smul.addr %s173, 4
          %s175 = scalar_lea.vmem %s0, %s174
          %s176 = sadd.s32 %s21, %s22
          %s177 = smul.u32 2, %s176
        $region24: #{tpu_custom_call.1} parent=19 // pred_fallthru
          _
      $region20: #{tpu_custom_call.1} parent=5 // pred_fallthru
        _
      %p178 = scmp.le.s32.totalorder 1, %s13
      %p179 = scmp.lt.s32.totalorder %s13, 3
      %p180 = pnand %p178, %p179
      %p181 = pneg %p180
      // Predicated region
      $region25: #{tpu_custom_call.1} parent=5 // pred_check
        _
      $region26: #{tpu_custom_call.1} parent=5 // pred_check_branch
        %183 = sbr.rel (%p180) target = $region28
      $region27: #{tpu_custom_call.1} parent=5 // pred_region
        %s184 = ssub.s32 %s13, 1
        %s185 = sadd.s32 %s24, %s25
        %s186 = smul.u32 2, %s185
        %p187 = scmp.lt.s32.totalorder %s23, 1
        %s188 = scalar_select %p187, %s23, 1
        %p189 = scmp.lt.s32.totalorder %s186, 1
        %s190 = scalar_select %p189, %s186, 1
        %s191 = smul.addr %s188, 2
        %s192 = sadd.s32 %s190, %s191
        %s193 = smul.addr %s192, 4
        %s194 = scalar_lea.vmem %s0, %s193
        %p195 = pneg %p62
        %p196 = pneg %p59
        %p197 = pneg %p83
        %p198 = pneg %p80
        %p199 = pneg %p113
        %p200 = pneg %p110
        %s201 = sand.u32 %s100, 1
        %s202 = scalar_lea.sflag [#allocation4], %s201
        %s203 = sand.u32 %s100, 1
        %s204 = smul.addr %s203, 32
        %s205 = scalar_lea.vmem [#allocation3], %s204
        %p206 = pneg %p141
        %p207 = pneg %p138
        %p208 = scmp.lt.s32.totalorder %s24, 0
        %s209 = scalar_select %p208, %s24, 0
        %p210 = scmp.lt.s32.totalorder %s23, 1
        %s211 = scalar_select %p210, %s23, 1
        %s212 = smul.addr %s211, 4
        %s213 = smul.addr %s209, 8
        %s214 = sadd.s32 %s212, %s213
        %s215 = smul.addr %s214, 8
        %s216 = scalar_lea.vmem %s3, %s215
        %s217 = sadd.s32 %s24, %s25
        %s218 = smul.u32 2, %s217
        %p219 = scmp.lt.s32.totalorder %s23, 1
        %s220 = scalar_select %p219, %s23, 1
        %p221 = scmp.lt.s32.totalorder %s218, 1
        %s222 = scalar_select %p221, %s218, 1
        %s223 = smul.addr %s220, 2
        %s224 = sadd.s32 %s222, %s223
        %s225 = smul.addr %s224, 4
        %s226 = scalar_lea.vmem %s0, %s225
        %s227 = sadd.s32 %s24, %s25
        %s228 = smul.u32 2, %s227
        %s229 = sadd.s32 %s24, %s25
        %s230 = smul.u32 2, %s229
        %p231 = scmp.lt.s32.totalorder %s24, 0
        %s232 = scalar_select %p231, %s24, 0
        %p233 = scmp.lt.s32.totalorder %s23, 1
        %s234 = scalar_select %p233, %s23, 1
        %s235 = smul.addr %s234, 4
        %s236 = smul.addr %s232, 8
        %s237 = sadd.s32 %s235, %s236
        %s238 = smul.addr %s237, 8
        %s239 = scalar_lea.vmem %s3, %s238
        %p241 = scmp.eq.s32.totalorder %s25, 0
        // Predicated region
        $region29: #{tpu_custom_call.1} parent=27 // pred_check
          %p242 = pneg %p241
        $region30: #{tpu_custom_call.1} parent=27 // pred_check_branch
          %244 = sbr.rel (%p242) target = $region32
        $region31: #{tpu_custom_call.1} parent=27 // pred_region
          %vm245 = vcmask 7168
          %246 = vst.msk [vmem:[#allocation2] sm:$0xff] %vm245, 0.0
          %247 = vst.msk [vmem:[#allocation2 + $0x8] sm:$0xff] %vm245, 0.0
          %248 = vst.msk [vmem:[#allocation2 + $0x10] sm:$0xff] %vm245, 0.0
          %249 = vst.msk [vmem:[#allocation2 + $0x18] sm:$0xff] %vm245, 0.0
        $region32: #{tpu_custom_call.1} parent=27 // pred_fallthru
          _
        %v250 = vld [vmem:[%s226] sm:$0xff]
        %252 = vst [vmem:[#allocation1] ss:$2 sm:$0xff] %v250
        %v253 = vld.sshfl [vmem:[#allocation1] sm:$0xff pattern:$0x75316420]
        %v254 = vld.sshfl [vmem:[#allocation1 + $0x8] sm:$0xff pattern:$0x75316420]
        %v257 = vpack.c.bf16 %v253, %v253
        %v258 = vpack.c.bf16 %v254, %v254
        %v259 = vld [vmem:[%s1] sm:$0xf]
        %v260 = vld [vmem:[%s1 + $0x4] sm:$0xf]
        %v261 = vld [vmem:[%s1 + $0x8] sm:$0xf]
        %v262 = vld [vmem:[%s1 + $0xc] sm:$0xf]
        %v267 = vunpack.c.l.b16 %v259
        %v268 = vunpack.c.l.b16 %v260
        %v269 = vunpack.c.l.b16 %v261
        %v270 = vunpack.c.l.b16 %v262
        %v271 = vpack.c.b16 %v268, %v267
        %v272 = vpack.c.b16 %v270, %v269
        %vm273 = vcmask 31744
        %v275 = vsel %vm273, %v271, 0
        %v278 = vsel %vm273, %v272, 0
        %vm280 = vcmask 1041408
        %v282 = vsel %vm280, %v257, 0
        %v285 = vsel %vm280, %v258, 0
        %287 = vmatpush.bf16.msra.mxu0 0
        %288 = vmatpush.bf16.msra.mxu0 0
        %289 = vmatpush.bf16.msra.mxu0 0
        %290 = vmatpush.bf16.msra.mxu0 0
        %291 = vmatpush.bf16.msra.mxu0 0
        %292 = vmatpush.bf16.msra.mxu0 0
        %293 = vmatpush.bf16.msra.mxu0 0
        %294 = vmatpush.bf16.msra.mxu0 %v282
        %295 = vmatmul.bf16.gmra.mxu0 %v275
        %v296 = vpop.f32.mrf.mxu0
        %v297 = vadd.f32 0.0, %v296
        %v298 = vpop.f32.mrf.mxu0
        %v299 = vadd.f32 0.0, %v298
        %300 = vmatmul.bf16.gmra.mxu0 %v278
        %v301 = vpop.f32.mrf.mxu0
        %v302 = vadd.f32 0.0, %v301
        %v303 = vpop.f32.mrf.mxu0
        %v304 = vadd.f32 0.0, %v303
        %305 = vdwg.mxu0
        %306 = vmatpush.bf16.msra.mxu0 0
        %307 = vmatpush.bf16.msra.mxu0 0
        %308 = vmatpush.bf16.msra.mxu0 0
        %309 = vmatpush.bf16.msra.mxu0 0
        %310 = vmatpush.bf16.msra.mxu0 0
        %311 = vmatpush.bf16.msra.mxu0 0
        %312 = vmatpush.bf16.msra.mxu0 0
        %313 = vmatpush.bf16.msra.mxu0 %v285
        %314 = vmatmul.bf16.gmra.mxu0 %v275
        %v315 = vpop.f32.mrf.mxu0
        %v316 = vadd.f32 0.0, %v315
        %v317 = vpop.f32.mrf.mxu0
        %v318 = vadd.f32 0.0, %v317
        %319 = vmatmul.bf16.gmra.mxu0 %v278
        %v320 = vpop.f32.mrf.mxu0
        %v321 = vadd.f32 0.0, %v320
        %v322 = vpop.f32.mrf.mxu0
        %v323 = vadd.f32 0.0, %v322
        %324 = vdwg.mxu0
        %v325 = vpack.c.bf16 %v316, %v297
        %v326 = vpack.c.bf16 %v318, %v299
        %v327 = vpack.c.bf16 %v321, %v302
        %v328 = vpack.c.bf16 %v323, %v304
        %329 = vst [vmem:[%s205] sm:$0xff] %v325
        %330 = vst [vmem:[%s205 + $0x8] sm:$0xff] %v326
        %331 = vst [vmem:[%s205 + $0x10] sm:$0xff] %v327
        %332 = vst [vmem:[%s205 + $0x18] sm:$0xff] %v328
        %v333 = vld [vmem:[#allocation2] sm:$0xff]
        %v334 = vld [vmem:[#allocation2 + $0x8] sm:$0xff]
        %v335 = vld [vmem:[#allocation2 + $0x10] sm:$0xff]
        %v336 = vld [vmem:[#allocation2 + $0x18] sm:$0xff]
        %v337 = vadd.f32 %v297, %v316
        %338 = vadd.xlane.f32.xlu0 %v337
        %v339 = vpop.xlane.xlu0 %338
        %v340 = vadd.f32 %v299, %v318
        %341 = vadd.xlane.f32.xlu0 %v340
        %v342 = vpop.xlane.xlu0 %341
        %v343 = vadd.f32 %v302, %v321
        %344 = vadd.xlane.f32.xlu0 %v343
        %v345 = vpop.xlane.xlu0 %344
        %v346 = vadd.f32 %v304, %v323
        %347 = vadd.xlane.f32.xlu0 %v346
        %v348 = vpop.xlane.xlu0 %347
        %v349 = vadd.f32 %v333, %v339
        %v350 = vadd.f32 %v334, %v342
        %v351 = vadd.f32 %v335, %v345
        %v352 = vadd.f32 %v336, %v348
        %vm353 = vcmask 7168
        %354 = vst.msk [vmem:[#allocation2] sm:$0xff] %vm353, %v349
        %355 = vst.msk [vmem:[#allocation2 + $0x8] sm:$0xff] %vm353, %v350
        %356 = vst.msk [vmem:[#allocation2 + $0x10] sm:$0xff] %vm353, %v351
        %357 = vst.msk [vmem:[#allocation2 + $0x18] sm:$0xff] %vm353, %v352
        // Predicated region
        $region33: #{tpu_custom_call.1} parent=27 // pred_check
          %p358 = pneg %p241
        $region34: #{tpu_custom_call.1} parent=27 // pred_check_branch
          %360 = sbr.rel (%p358) target = $region36
        $region35: #{tpu_custom_call.1} parent=27 // pred_region
          %v361 = vld [vmem:[#allocation2] sm:$0xff]
          %v362 = vld [vmem:[#allocation2 + $0x8] sm:$0xff]
          %v363 = vld [vmem:[#allocation2 + $0x10] sm:$0xff]
          %v364 = vld [vmem:[#allocation2 + $0x18] sm:$0xff]
          %365 = vst.msk [vmem:[%s239] sm:$0xff] %vm353, %v361
          %366 = vst.msk [vmem:[%s239 + $0x8] sm:$0xff] %vm353, %v362
          %367 = vst.msk [vmem:[%s239 + $0x10] sm:$0xff] %vm353, %v363
          %368 = vst.msk [vmem:[%s239 + $0x18] sm:$0xff] %vm353, %v364
        $region36: #{tpu_custom_call.1} parent=27 // pred_fallthru
          _
        %s369 = sand.u32 %s100, 1
        %s370 = scalar_lea.sflag [#allocation4], %s369
        %s371 = sand.u32 %s100, 1
        %s372 = smul.addr %s371, 32
        %s373 = scalar_lea.vmem [#allocation3], %s372
        %p374 = scmp.lt.s32.totalorder %s24, 0
        %s375 = scalar_select %p374, %s24, 0
        %p376 = scmp.lt.s32.totalorder %s23, 1
        %s377 = scalar_select %p376, %s23, 1
        %s378 = smul.addr %s377, 4
        %s379 = smul.addr %s375, 8
        %s380 = sadd.s32 %s378, %s379
        %s381 = smul.addr %s380, 8
        %s382 = scalar_lea.vmem %s3, %s381
        // Predicated region
        $region37: #{tpu_custom_call.1} parent=27 // pred_check
          %p383 = pneg %p110
        $region38: #{tpu_custom_call.1} parent=27 // pred_check_branch
          %385 = sbr.rel (%p383) target = $region40
        $region39: #{tpu_custom_call.1} parent=27 // pred_region
          %s386 = sadd.s32 %s24, %s25
          %s387 = smul.u32 2, %s386
          %389 = vsyncadd %s370, 0
          %s390 = smul.addr %s23, 8
          %s391 = sadd.s32 %s387, %s390
          %s392 = smul.addr %s391, 4
          %s393 = scalar_lea.hbm %s2, %s392
          %s394 = sshll.u32 %s373, 4
          %s395 = int_to_ptr.vmem [resolvable:$true] %s394
          %s396 = sshll.u32 %s393, 4
          %s397 = int_to_ptr.hbm [resolvable:$true] %s396
          %402 = dma.vmem_to_hbm [thread:$0]  %s395, 512, %s397, %s370, 128, 128, 8
        $region40: #{tpu_custom_call.1} parent=27 // pred_fallthru
          _
        // Predicated region
        $region41: #{tpu_custom_call.1} parent=27 // pred_check
          %p403 = pneg %p138
        $region42: #{tpu_custom_call.1} parent=27 // pred_check_branch
          %405 = sbr.rel (%p403) target = $region44
        $region43: #{tpu_custom_call.1} parent=27 // pred_region
          _
        $region44: #{tpu_custom_call.1} parent=27 // pred_fallthru
          _
      $region28: #{tpu_custom_call.1} parent=5 // pred_fallthru
        _
      %p406 = scmp.le.s32.totalorder 2, %s13
      // Predicated region
      $region45: #{tpu_custom_call.1} parent=5 // pred_check
        %p407 = pneg %p406
      $region46: #{tpu_custom_call.1} parent=5 // pred_check_branch
        %409 = sbr.rel (%p407) target = $region48
      $region47: #{tpu_custom_call.1} parent=5 // pred_region
        %s410 = ssub.s32 %s13, 2
        // Predicated region
        $region49: #{tpu_custom_call.1} parent=47 // pred_check
          %p411 = pneg %p116
        $region50: #{tpu_custom_call.1} parent=47 // pred_check_branch
          %413 = sbr.rel (%p411) target = $region52
        $region51: #{tpu_custom_call.1} parent=47 // pred_region
          %s414 = sand.u32 %s101, 1
          %s415 = scalar_lea.sflag [#allocation4], %s414
          %s416 = sand.u32 %s101, 1
          %s417 = smul.addr %s416, 32
          %s418 = scalar_lea.vmem [#allocation3], %s417
          %420 = dma.done %s415, 512
        $region52: #{tpu_custom_call.1} parent=47 // pred_fallthru
          _
        // Predicated region
        $region53: #{tpu_custom_call.1} parent=47 // pred_check
          %p421 = pneg %p144
        $region54: #{tpu_custom_call.1} parent=47 // pred_check_branch
          %423 = sbr.rel (%p421) target = $region56
        $region55: #{tpu_custom_call.1} parent=47 // pred_region
          %p424 = scmp.lt.s32.totalorder %s27, 0
          %s425 = scalar_select %p424, %s27, 0
          %p426 = scmp.lt.s32.totalorder %s26, 1
          %s427 = scalar_select %p426, %s26, 1
          %s428 = smul.addr %s427, 4
          %s429 = smul.addr %s425, 8
          %s430 = sadd.s32 %s428, %s429
          %s431 = smul.addr %s430, 8
          %s432 = scalar_lea.vmem %s3, %s431
        $region56: #{tpu_custom_call.1} parent=47 // pred_fallthru
          _
      $region48: #{tpu_custom_call.1} parent=5 // pred_fallthru
        _
    $region6: #{tpu_custom_call.1} parent=1 // loop_footer
      %s17 = sadd.s32 1, %s13
    $region7: #{tpu_custom_call.1} parent=1 // loop_footer_branch
      %12 = sbr.rel target = $region3
    $region8: #{tpu_custom_call.1} parent=1 // loop_exit
      _
    %433 = vsyncpa [#allocation4], 1
    %s434 = scalar_lea.sflag [#allocation4], 1
    %435 = vsyncpa %s434, 1

</llo_original>
